<compile_context>
chip_gen: v5e
topology: v5e:2x2
jax: 0.10.0
libtpu: 0.0.40
codegen_flags: <defaults>
</compile_context>

<pallas_src>
import functools

import jax
import jax.numpy as jnp
from jax import lax
from jax.experimental import pallas as pl
from jax.experimental.pallas import tpu as pltpu


def _round_up(n, m):
    return ((n + m - 1) // m) * m


def _vmem_physical_bytes():
    """Best-effort physical VMEM query; falls back to the v7x (smallest) size."""
    try:
        info = pltpu.get_tpu_info()
        for attr in ("vmem_capacity_bytes", "vmem_bytes", "vmem_size_bytes"):
            v = getattr(info, attr, None)
            if v:
                return int(v)
    except Exception:
        pass
    return 64 << 20


def adv_net_kernel(x_ref, w1_ref, b1_ref, w2_ref, b2_ref, w3_ref, b3_ref, o_ref):
    cd = w1_ref.dtype
    x = x_ref[...].astype(cd)                                 # f32 -> bf16 in-kernel (VPU)

    # ad_layer1 + relu1   (dropout1 == identity in eval)
    h1 = jnp.dot(x, w1_ref[...], preferred_element_type=jnp.float32)
    h1 = jnp.maximum(h1 + b1_ref[...], 0.0)                   # f32

    # ad_layer2 + relu2   (dropout2 == identity in eval)
    h2 = jnp.dot(h1.astype(cd), w2_ref[...], preferred_element_type=jnp.float32)
    h2 = jnp.maximum(h2 + b2_ref[...], 0.0)                   # f32

    # ad_layer3 (out_features == 1): contract (1, Hp) x (tile_b, Hp) -> (1, tile_b).
    # Fused multiply+reduce on the MXU; lane-dense result goes straight into the store.
    logits = lax.dot_general(
        w3_ref[...], h2.astype(cd),
        dimension_numbers=(((1,), (1,)), ((), ())),
        preferred_element_type=jnp.float32)                   # (1, tile_b)
    logits = logits + b3_ref[0, 0]                            # scalar bias from SMEM

    # sigmoid (exp on the EUP; add/div on the VPU)
    o_ref[...] = (1.0 / (1.0 + jnp.exp(-logits))).astype(o_ref.dtype)


def prepare_params(params, compute_dtype=jnp.bfloat16):
    """One-time padding + bf16 cast of the parameters (hoisted out of the forward).

    Zero-padding in_feature/hidden to multiples of 128 is exact for this forward pass.
    """
    F, H = params["w1"].shape
    Fp, Hp = _round_up(F, 128), _round_up(H, 128)
    cd, f32 = compute_dtype, jnp.float32
    return {
        "w1": jnp.zeros((Fp, Hp), cd).at[:F, :H].set(params["w1"].astype(cd)),
        "w2": jnp.zeros((Hp, Hp), cd).at[:H, :H].set(params["w2"].astype(cd)),
        "w3": jnp.zeros((1, Hp), cd).at[:, :H].set(params["w3"].reshape(1, H).astype(cd)),
        "b1": jnp.zeros((1, Hp), f32).at[:, :H].set(params["b1"].reshape(1, H).astype(f32)),
        "b2": jnp.zeros((1, Hp), f32).at[:, :H].set(params["b2"].reshape(1, H).astype(f32)),
        "b3": params["b3"].reshape(1, 1).astype(f32),
    }


@functools.partial(jax.jit, static_argnames=("tile_b",))
def adversarial_network_forward(x, prepared, *, tile_b=512):
    """x: (B, in_feature); prepared: output of prepare_params(). Returns (B, 1) f32."""
    B, F = x.shape
    Fp, Hp = prepared["w1"].shape
    assert F <= Fp, f"in_feature {F} larger than prepared padding {Fp}"
    f32 = jnp.float32
    w_isz = jnp.dtype(prepared["w1"].dtype).itemsize
    x_isz = jnp.dtype(x.dtype).itemsize

    # --- batch tile selection -------------------------------------------------
    if B <= tile_b:
        tile_b = max(16, _round_up(B, 16))     # single tile; 16 = bf16 sublane tile
    else:
        tile_b = _round_up(tile_b, 128)        # multi-tile; keep blocks (8,128)-aligned
    # TODO(synk): on v7x prefer an even num_tiles + pltpu.CORE_PARALLEL for 2-TC sharding.

    def vmem_bytes(tb):
        return (2 * tb * Fp * x_isz                       # x tiles (double-buffered)
                + 2 * tb * 4                              # out rows (double-buffered)
                + 2 * (Fp * Hp + Hp * Hp + Hp) * w_isz    # weights: pipeliner double-buffers
                                                          #   even constant-index blocks
                + 2 * 2 * Hp * 4                          # b1/b2 (double-buffered, f32)
                + 3 * tb * Hp * 4)                        # live f32 h1/h2/temp

    # Generation-aware ceiling: ~100 MiB on v5e/v6e (128 MiB), ~51 MiB on v7x (64 MiB).
    vmem_ceiling = min(100 << 20, int(_vmem_physical_bytes() * 0.80))
    while tile_b > 128 and int(1.25 * vmem_bytes(tile_b)) > vmem_ceiling:
        tile_b //= 2                                      # shrink x stream before giving up
    # TODO(synk): tiled Fp/Hp fallback when resident weights alone overflow the budget.
    vmem_limit = int(min(vmem_ceiling, max(32 << 20, int(1.25 * vmem_bytes(tile_b)))))

    B_pad = _round_up(B, tile_b)
    num_tiles = B_pad // tile_b

    # --- activations: pad only when needed (skipped when already aligned) ------
    if B == B_pad and F == Fp:
        x_p = x
    else:
        x_p = jnp.zeros((B_pad, Fp), x.dtype).at[:B, :F].set(x)

    out = pl.pallas_call(
        adv_net_kernel,
        out_shape=jax.ShapeDtypeStruct((1, B_pad), f32),
        grid=(num_tiles,),
        in_specs=[
            pl.BlockSpec((tile_b, Fp), lambda i: (i, 0)),        # x: streamed per batch tile
            pl.BlockSpec((Fp, Hp), lambda i: (0, 0)),            # w1: VMEM-resident
            pl.BlockSpec((1, Hp), lambda i: (0, 0)),             # b1
            pl.BlockSpec((Hp, Hp), lambda i: (0, 0)),            # w2
            pl.BlockSpec((1, Hp), lambda i: (0, 0)),             # b2
            pl.BlockSpec((1, Hp), lambda i: (0, 0)),             # w3 (row form)
            pl.BlockSpec(memory_space=pltpu.MemorySpace.SMEM),   # b3 scalar
        ],
        out_specs=pl.BlockSpec((1, tile_b), lambda i: (0, i)),   # lane-dense (1, B_pad) row
        compiler_params=pltpu.CompilerParams(
            dimension_semantics=("parallel",),
            vmem_limit_bytes=vmem_limit,
        ),
    )(x_p, prepared["w1"], prepared["b1"], prepared["w2"], prepared["b2"],
      prepared["w3"], prepared["b3"])

    return out[0, :B][:, None]                # (B, 1), matching the PyTorch module


def init_params(key, in_feature, hidden_size):
    """Deterministic init mirroring init_weights: xavier_normal_ weights, zero biases."""
    k1, k2, k3 = jax.random.split(key, 3)

    def xavier_normal(k, fan_in, fan_out):
        std = (2.0 / (fan_in + fan_out)) ** 0.5
        return std * jax.random.normal(k, (fan_in, fan_out), dtype=jnp.float32)

    return {
        "w1": xavier_normal(k1, in_feature, hidden_size),
        "b1": jnp.zeros((1, hidden_size), jnp.float32),
        "w2": xavier_normal(k2, hidden_size, hidden_size),
        "b2": jnp.zeros((1, hidden_size), jnp.float32),
        "w3": xavier_normal(k3, hidden_size, 1),
        "b3": jnp.zeros((1, 1), jnp.float32),
    }


def reference_forward(x, params, compute_dtype=jnp.bfloat16):
    """Pure-JAX reference with the kernel's mixed precision (bf16 MXU, f32 accumulate)."""
    cd = compute_dtype
    h1 = jnp.maximum(
        jnp.dot(x.astype(cd), params["w1"].astype(cd),
                preferred_element_type=jnp.float32) + params["b1"], 0.0)
    h2 = jnp.maximum(
        jnp.dot(h1.astype(cd), params["w2"].astype(cd),
                preferred_element_type=jnp.float32) + params["b2"], 0.0)
    logits = jnp.dot(h2.astype(cd), params["w3"].astype(cd),
                     preferred_element_type=jnp.float32) + params["b3"].reshape(1, 1)
    return jax.nn.sigmoid(logits)


def reference_forward_f32(x, params):
    h1 = jnp.maximum(x @ params["w1"] + params["b1"], 0.0)
    h2 = jnp.maximum(h1 @ params["w2"] + params["b2"], 0.0)
    return jax.nn.sigmoid(h2 @ params["w3"] + params["b3"])


if __name__ == "__main__":
    key = jax.random.PRNGKey(0)
    kx, kp = jax.random.split(key)

    batch, in_feature, hidden_size = 8, 32, 32
    x = jax.random.normal(kx, (batch, in_feature), dtype=jnp.float32)
    params = init_params(kp, in_feature, hidden_size)
    prepared = prepare_params(params)          # one-time pad + bf16 cast (hoisted)

    y = adversarial_network_forward(x, prepared)
    y = jax.block_until_ready(y)
    assert y.shape == (batch, 1), y.shape

    # Matched-precision reference (bf16 MXU operands, f32 accumulate) -> tight tolerance.
    y_ref = reference_forward(x, params)
    err = float(jnp.max(jnp.abs(y - y_ref)))
    assert jnp.allclose(y, y_ref, atol=1e-4, rtol=1e-4), f"max abs err vs ref: {err}"

    # Full-f32 reference as a loose sanity check on the bf16 MXU path.
    y_ref_f32 = reference_forward_f32(x, params)
    assert jnp.allclose(y, y_ref_f32, atol=5e-2, rtol=5e-2)

    print("KERNEL_OK")
</pallas_src>

<mosaic_0001>
module attributes {stable_mosaic.version = 11 : i64} {
  func.func @adv_net_kernel(%arg0: i32, %arg1: memref<16x128xf32, #tpu.memory_space<vmem>>, %arg2: memref<128x128xbf16, #tpu.memory_space<vmem>>, %arg3: memref<1x128xf32, #tpu.memory_space<vmem>>, %arg4: memref<128x128xbf16, #tpu.memory_space<vmem>>, %arg5: memref<1x128xf32, #tpu.memory_space<vmem>>, %arg6: memref<1x128xbf16, #tpu.memory_space<vmem>>, %arg7: memref<1x1xf32, #tpu.memory_space<smem>>, %arg8: memref<1x16xf32, #tpu.memory_space<vmem>>) attributes {dimension_semantics = [#tpu.dimension_semantics<parallel>], iteration_bounds = array<i64: 1>, scalar_prefetch = 0 : i64, scratch_operands = 0 : i64, tpu.core_type = #tpu.core_type<tc>, window_params = [{transform_indices = @transform_0, window_bounds = array<i64: 16, 128>}, {pipeline_mode = #tpu.pipeline_mode<synchronous>, transform_indices = @transform_1, window_bounds = array<i64: 128, 128>}, {pipeline_mode = #tpu.pipeline_mode<synchronous>, transform_indices = @transform_2, window_bounds = array<i64: 1, 128>}, {pipeline_mode = #tpu.pipeline_mode<synchronous>, transform_indices = @transform_3, window_bounds = array<i64: 128, 128>}, {pipeline_mode = #tpu.pipeline_mode<synchronous>, transform_indices = @transform_4, window_bounds = array<i64: 1, 128>}, {pipeline_mode = #tpu.pipeline_mode<synchronous>, transform_indices = @transform_5, window_bounds = array<i64: 1, 128>}, {transform_indices = @transform_6, window_bounds = array<i64: 1, 1>}, {transform_indices = @transform_7, window_bounds = array<i64: 1, 16>}]} {
    %c0 = arith.constant 0 : index
    %c0_0 = arith.constant 0 : index
    %0 = vector.load %arg1[%c0, %c0_0] : memref<16x128xf32, #tpu.memory_space<vmem>>, vector<16x128xf32>
    %1 = arith.truncf %0 : vector<16x128xf32> to vector<16x128xbf16>
    %c0_1 = arith.constant 0 : index
    %c0_2 = arith.constant 0 : index
    %2 = vector.load %arg2[%c0_1, %c0_2] : memref<128x128xbf16, #tpu.memory_space<vmem>>, vector<128x128xbf16>
    %cst = arith.constant dense<0.000000e+00> : vector<16x128xf32>
    %3 = tpu.matmul %1, %2, %cst {dimension_numbers = #tpu.dot_dimension_numbers<[1], [0], [0], [1], [0, 0, 1, 1], [], []>} : vector<16x128xbf16>, vector<128x128xbf16>, vector<16x128xf32> -> vector<16x128xf32>
    %c0_3 = arith.constant 0 : index
    %c0_4 = arith.constant 0 : index
    %4 = vector.load %arg3[%c0_3, %c0_4] : memref<1x128xf32, #tpu.memory_space<vmem>>, vector<1x128xf32>
    %5 = vector.broadcast %4 : vector<1x128xf32> to vector<16x128xf32>
    %6 = arith.addf %3, %5 : vector<16x128xf32>
    %cst_5 = arith.constant 0.000000e+00 : f32
    %7 = vector.broadcast %cst_5 : f32 to vector<16x128xf32>
    %8 = arith.maximumf %6, %7 : vector<16x128xf32>
    %9 = arith.truncf %8 : vector<16x128xf32> to vector<16x128xbf16>
    %c0_6 = arith.constant 0 : index
    %c0_7 = arith.constant 0 : index
    %10 = vector.load %arg4[%c0_6, %c0_7] : memref<128x128xbf16, #tpu.memory_space<vmem>>, vector<128x128xbf16>
    %cst_8 = arith.constant dense<0.000000e+00> : vector<16x128xf32>
    %11 = tpu.matmul %9, %10, %cst_8 {dimension_numbers = #tpu.dot_dimension_numbers<[1], [0], [0], [1], [0, 0, 1, 1], [], []>} : vector<16x128xbf16>, vector<128x128xbf16>, vector<16x128xf32> -> vector<16x128xf32>
    %c0_9 = arith.constant 0 : index
    %c0_10 = arith.constant 0 : index
    %12 = vector.load %arg5[%c0_9, %c0_10] : memref<1x128xf32, #tpu.memory_space<vmem>>, vector<1x128xf32>
    %13 = vector.broadcast %12 : vector<1x128xf32> to vector<16x128xf32>
    %14 = arith.addf %11, %13 : vector<16x128xf32>
    %cst_11 = arith.constant 0.000000e+00 : f32
    %15 = vector.broadcast %cst_11 : f32 to vector<16x128xf32>
    %16 = arith.maximumf %14, %15 : vector<16x128xf32>
    %c0_12 = arith.constant 0 : index
    %c0_13 = arith.constant 0 : index
    %17 = vector.load %arg6[%c0_12, %c0_13] : memref<1x128xbf16, #tpu.memory_space<vmem>>, vector<1x128xbf16>
    %18 = arith.truncf %16 : vector<16x128xf32> to vector<16x128xbf16>
    %cst_14 = arith.constant dense<0.000000e+00> : vector<1x16xf32>
    %19 = tpu.matmul %17, %18, %cst_14 {dimension_numbers = #tpu.dot_dimension_numbers<[1], [1], [0], [0], [0, 0, 1, 0], [], []>} : vector<1x128xbf16>, vector<16x128xbf16>, vector<1x16xf32> -> vector<1x16xf32>
    %c0_15 = arith.constant 0 : index
    %c0_16 = arith.constant 0 : index
    %20 = memref.load %arg7[%c0_15, %c0_16] : memref<1x1xf32, #tpu.memory_space<smem>>
    %21 = vector.broadcast %20 : f32 to vector<1x16xf32>
    %22 = arith.addf %19, %21 : vector<1x16xf32>
    %cst_17 = arith.constant 0.000000e+00 : f32
    %23 = vector.broadcast %cst_17 : f32 to vector<1x16xf32>
    %24 = arith.subf %23, %22 : vector<1x16xf32>
    %25 = math.exp %24 : vector<1x16xf32>
    %cst_18 = arith.constant 1.000000e+00 : f32
    %26 = vector.broadcast %cst_18 : f32 to vector<1x16xf32>
    %27 = arith.addf %26, %25 : vector<1x16xf32>
    %cst_19 = arith.constant 1.000000e+00 : f32
    %28 = vector.broadcast %cst_19 : f32 to vector<1x16xf32>
    %29 = arith.divf %28, %27 : vector<1x16xf32>
    %c0_20 = arith.constant 0 : index
    %c0_21 = arith.constant 0 : index
    %30 = vector.load %arg8[%c0_20, %c0_21] : memref<1x16xf32, #tpu.memory_space<vmem>>, vector<1x16xf32>
    tpu.vector_store %arg8[%c0_20, %c0_21], %29 {strides = array<i32>} : memref<1x16xf32, #tpu.memory_space<vmem>>, vector<1x16xf32>,
    return
  }
  func.func @transform_0(%arg0: i32) -> (i32, i32) {
    %c0_i32 = arith.constant 0 : i32
    %c0_i32_0 = arith.constant 0 : i32
    return %arg0, %c0_i32 : i32, i32
  }
  func.func @transform_1(%arg0: i32) -> (i32, i32) {
    %c0_i32 = arith.constant 0 : i32
    %c0_i32_0 = arith.constant 0 : i32
    %c0_i32_1 = arith.constant 0 : i32
    return %c0_i32, %c0_i32_0 : i32, i32
  }
  func.func @transform_2(%arg0: i32) -> (i32, i32) {
    %c0_i32 = arith.constant 0 : i32
    %c0_i32_0 = arith.constant 0 : i32
    %c0_i32_1 = arith.constant 0 : i32
    return %c0_i32, %c0_i32_0 : i32, i32
  }
  func.func @transform_3(%arg0: i32) -> (i32, i32) {
    %c0_i32 = arith.constant 0 : i32
    %c0_i32_0 = arith.constant 0 : i32
    %c0_i32_1 = arith.constant 0 : i32
    return %c0_i32, %c0_i32_0 : i32, i32
  }
  func.func @transform_4(%arg0: i32) -> (i32, i32) {
    %c0_i32 = arith.constant 0 : i32
    %c0_i32_0 = arith.constant 0 : i32
    %c0_i32_1 = arith.constant 0 : i32
    return %c0_i32, %c0_i32_0 : i32, i32
  }
  func.func @transform_5(%arg0: i32) -> (i32, i32) {
    %c0_i32 = arith.constant 0 : i32
    %c0_i32_0 = arith.constant 0 : i32
    %c0_i32_1 = arith.constant 0 : i32
    return %c0_i32, %c0_i32_0 : i32, i32
  }
  func.func @transform_6(%arg0: i32) -> (i32, i32) {
    %c0_i32 = arith.constant 0 : i32
    %c0_i32_0 = arith.constant 0 : i32
    %c0_i32_1 = arith.constant 0 : i32
    return %c0_i32, %c0_i32_0 : i32, i32
  }
  func.func @transform_7(%arg0: i32) -> (i32, i32) {
    %c0_i32 = arith.constant 0 : i32
    %c0_i32_0 = arith.constant 0 : i32
    return %c0_i32, %arg0 : i32, i32
  }
}

</mosaic_0001>

<llo_original>
// kernel: adversarial_network_forward.1
$region0: #{adversarial_network_forward.1}
  #allocation0 [shape = 'u32[]', space=smem, size = 0x4, offset = 0x4, fixed_abs, tag = 'smem constant byte address 0x4 - core index']
  #allocation1 [shape = 'u32[72,128]{1,0:T(1,128)}', space=vmem, size = 0x9000, scoped, tag = 'internal scratch']
  #allocation2 [shape = 'f32[1,1]{1,0:T(1,128)S(6)}', space=smem, size = 0x200, scoped, tag = 'scoped memory for adversarial_network_forward.1']
  %s0 = inlined_call_operand.vmem [shape: f32[16,128], index: 0, kind: input, shape index: {}]
  %s1 = inlined_call_operand.hbm [shape: bf16[128,128], index: 1, kind: input, shape index: {}]
  %s2 = inlined_call_operand.vmem [shape: f32[1,128], index: 2, kind: input, shape index: {}]
  %s3 = inlined_call_operand.hbm [shape: bf16[128,128], index: 3, kind: input, shape index: {}]
  %s4 = inlined_call_operand.vmem [shape: f32[1,128], index: 4, kind: input, shape index: {}]
  %s5 = inlined_call_operand.vmem [shape: bf16[1,128], index: 5, kind: input, shape index: {}]
  %s6 = inlined_call_operand.<no memory space> [shape: f32[1,1], index: 6, kind: input, shape index: {}]
  %s7 = inlined_call_operand.vmem [shape: f32[1,16], index: 7, kind: output, shape index: {}]
  %s8 = sld [smem:[#allocation0]]
  $region46: #{adversarial_network_forward.1} parent=0
    _
  %s10 = ssub.s32 1, %s8
  %s11 = scalar_select 0, %s10, %s8
  %12 = sst [smem:[#allocation2]] %s6
  $region1: #{adversarial_network_forward.1} parent=0
    #allocation3 [shape = 'u8[32768]{0}', space=vmem, size = 0x8000, scoped, tag = 'input window, operand 1, single buffered']
    #allocation4 [shape = 's32[1]{0}', space=sflag, size = 0x4, scoped, tag = 'scoped memory for adversarial_network_forward.1']
    #allocation5 [shape = 'u8[32768]{0}', space=vmem, size = 0x8000, scoped, tag = 'input window, operand 3, single buffered']
    #allocation6 [shape = 's32[1]{0}', space=sflag, size = 0x4, scoped, tag = 'scoped memory for adversarial_network_forward.1']
    %13 = vsyncpa [#allocation4], 0
    %14 = vsyncpa [#allocation6], 0
    // Predicated region
    $region2: #{adversarial_network_forward.1} parent=1 // pred_check
      _
    $region3: #{adversarial_network_forward.1} parent=1 // pred_check_branch
      %16 = sbr.rel (0) target = $region5
    $region4: #{adversarial_network_forward.1} parent=1 // pred_region
      _
    $region5: #{adversarial_network_forward.1} parent=1 // pred_fallthru
      _
    // Predicated region
    $region6: #{adversarial_network_forward.1} parent=1 // pred_check
      _
    $region7: #{adversarial_network_forward.1} parent=1 // pred_check_branch
      %18 = sbr.rel (0) target = $region9
    $region8: #{adversarial_network_forward.1} parent=1 // pred_region
      %20 = vsyncadd [#allocation4], 0
      %s21 = sshll.u32 %s1, 4
      %s22 = int_to_ptr.hbm [resolvable:$true] %s21
      %s23 = sshll.u32 [#allocation3], 4
      %s24 = int_to_ptr.vmem [resolvable:$true] %s23
      %29 = dma.hbm_to_vmem [thread:$0]  %s22, 1024, %s24, [#allocation4], 64, 64, 4
    $region9: #{adversarial_network_forward.1} parent=1 // pred_fallthru
      _
    // Predicated region
    $region10: #{adversarial_network_forward.1} parent=1 // pred_check
      _
    $region11: #{adversarial_network_forward.1} parent=1 // pred_check_branch
      %31 = sbr.rel (0) target = $region13
    $region12: #{adversarial_network_forward.1} parent=1 // pred_region
      _
    $region13: #{adversarial_network_forward.1} parent=1 // pred_fallthru
      _
    // Predicated region
    $region14: #{adversarial_network_forward.1} parent=1 // pred_check
      _
    $region15: #{adversarial_network_forward.1} parent=1 // pred_check_branch
      %33 = sbr.rel (0) target = $region17
    $region16: #{adversarial_network_forward.1} parent=1 // pred_region
      %35 = vsyncadd [#allocation6], 0
      %s36 = sshll.u32 %s3, 4
      %s37 = int_to_ptr.hbm [resolvable:$true] %s36
      %s38 = sshll.u32 [#allocation5], 4
      %s39 = int_to_ptr.vmem [resolvable:$true] %s38
      %44 = dma.hbm_to_vmem [thread:$0]  %s37, 1024, %s39, [#allocation6], 64, 64, 4
    $region17: #{adversarial_network_forward.1} parent=1 // pred_fallthru
      _
    // Predicated region
    $region18: #{adversarial_network_forward.1} parent=1 // pred_check
      _
    $region19: #{adversarial_network_forward.1} parent=1 // pred_check_branch
      %46 = sbr.rel (0) target = $region21
    $region20: #{adversarial_network_forward.1} parent=1 // pred_region
      _
    $region21: #{adversarial_network_forward.1} parent=1 // pred_fallthru
      _
    // Predicated region
    $region22: #{adversarial_network_forward.1} parent=1 // pred_check
      _
    $region23: #{adversarial_network_forward.1} parent=1 // pred_check_branch
      %48 = sbr.rel (0) target = $region25
    $region24: #{adversarial_network_forward.1} parent=1 // pred_region
      _
    $region25: #{adversarial_network_forward.1} parent=1 // pred_fallthru
      _
    // Predicated region
    $region26: #{adversarial_network_forward.1} parent=1 // pred_check
      _
    $region27: #{adversarial_network_forward.1} parent=1 // pred_check_branch
      %50 = sbr.rel (0) target = $region29
    $region28: #{adversarial_network_forward.1} parent=1 // pred_region
      _
    $region29: #{adversarial_network_forward.1} parent=1 // pred_fallthru
      _
    // Predicated region
    $region30: #{adversarial_network_forward.1} parent=1 // pred_check
      _
    $region31: #{adversarial_network_forward.1} parent=1 // pred_check_branch
      %52 = sbr.rel (0) target = $region33
    $region32: #{adversarial_network_forward.1} parent=1 // pred_region
      %54 = dma.done [#allocation4], 1024
    $region33: #{adversarial_network_forward.1} parent=1 // pred_fallthru
      _
    // Predicated region
    $region34: #{adversarial_network_forward.1} parent=1 // pred_check
      _
    $region35: #{adversarial_network_forward.1} parent=1 // pred_check_branch
      %56 = sbr.rel (0) target = $region37
    $region36: #{adversarial_network_forward.1} parent=1 // pred_region
      %58 = dma.done [#allocation6], 1024
    $region37: #{adversarial_network_forward.1} parent=1 // pred_fallthru
      _
    %v60 = vld [vmem:[%s0] sm:$0xff]
    %v61 = vld [vmem:[%s0 + $0x8] sm:$0xff]
    %v62 = vpack.c.bf16 %v61, %v60
    %v63 = vld [vmem:[#allocation3] sm:$0xf]
    %v64 = vld [vmem:[#allocation3 + $0x4] sm:$0xf]
    %v65 = vld [vmem:[#allocation3 + $0x8] sm:$0xf]
    %v66 = vld [vmem:[#allocation3 + $0xc] sm:$0xf]
    %v67 = vld [vmem:[#allocation3 + $0x10] sm:$0xf]
    %v68 = vld [vmem:[#allocation3 + $0x14] sm:$0xf]
    %v69 = vld [vmem:[#allocation3 + $0x18] sm:$0xf]
    %v70 = vld [vmem:[#allocation3 + $0x1c] sm:$0xf]
    %v71 = vld [vmem:[#allocation3 + $0x20] sm:$0xf]
    %v72 = vld [vmem:[#allocation3 + $0x24] sm:$0xf]
    %v73 = vld [vmem:[#allocation3 + $0x28] sm:$0xf]
    %v74 = vld [vmem:[#allocation3 + $0x2c] sm:$0xf]
    %v75 = vld [vmem:[#allocation3 + $0x30] sm:$0xf]
    %v76 = vld [vmem:[#allocation3 + $0x34] sm:$0xf]
    %v77 = vld [vmem:[#allocation3 + $0x38] sm:$0xf]
    %v78 = vld [vmem:[#allocation3 + $0x3c] sm:$0xf]
    %v79 = vld [vmem:[%s2] sm:$0x1]
    %v81 = vperm.slane %v79, 0
    %v99 = vunpack.c.l.b16 %v63
    %v100 = vunpack.c.l.b16 %v64
    %v101 = vunpack.c.l.b16 %v65
    %v102 = vunpack.c.l.b16 %v66
    %v103 = vunpack.c.l.b16 %v67
    %v104 = vunpack.c.l.b16 %v68
    %v105 = vunpack.c.l.b16 %v69
    %v106 = vunpack.c.l.b16 %v70
    %v107 = vunpack.c.l.b16 %v71
    %v108 = vunpack.c.l.b16 %v72
    %v109 = vunpack.c.l.b16 %v73
    %v110 = vunpack.c.l.b16 %v74
    %v111 = vunpack.c.l.b16 %v75
    %v112 = vunpack.c.l.b16 %v76
    %v113 = vunpack.c.l.b16 %v77
    %v114 = vunpack.c.l.b16 %v78
    %v115 = vpack.c.b16 %v100, %v99
    %v116 = vpack.c.b16 %v102, %v101
    %v117 = vpack.c.b16 %v104, %v103
    %v118 = vpack.c.b16 %v106, %v105
    %v119 = vpack.c.b16 %v108, %v107
    %v120 = vpack.c.b16 %v110, %v109
    %v121 = vpack.c.b16 %v112, %v111
    %v122 = vpack.c.b16 %v114, %v113
    %131 = vmatpush.bf16.msra.mxu0 %v122
    %132 = vmatpush.bf16.msra.mxu0 %v121
    %133 = vmatpush.bf16.msra.mxu0 %v120
    %134 = vmatpush.bf16.msra.mxu0 %v119
    %135 = vmatpush.bf16.msra.mxu0 %v118
    %136 = vmatpush.bf16.msra.mxu0 %v117
    %137 = vmatpush.bf16.msra.mxu0 %v116
    %138 = vmatpush.bf16.msra.mxu0 %v115
    %139 = vmatmul.bf16.gmra.mxu0 %v62
    %v140 = vpop.f32.mrf.mxu0
    %v141 = vadd.f32 %v81, %v140
    %v142 = vpop.f32.mrf.mxu0
    %v143 = vadd.f32 %v81, %v142
    %144 = vdwg.mxu0
    %v145 = vmax.f32 %v141, 0.0
    %v146 = vmax.f32 %v143, 0.0
    %v147 = vpack.c.bf16 %v146, %v145
    %v148 = vld [vmem:[#allocation5] sm:$0xf]
    %v149 = vld [vmem:[#allocation5 + $0x4] sm:$0xf]
    %v150 = vld [vmem:[#allocation5 + $0x8] sm:$0xf]
    %v151 = vld [vmem:[#allocation5 + $0xc] sm:$0xf]
    %v152 = vld [vmem:[#allocation5 + $0x10] sm:$0xf]
    %v153 = vld [vmem:[#allocation5 + $0x14] sm:$0xf]
    %v154 = vld [vmem:[#allocation5 + $0x18] sm:$0xf]
    %v155 = vld [vmem:[#allocation5 + $0x1c] sm:$0xf]
    %v156 = vld [vmem:[#allocation5 + $0x20] sm:$0xf]
    %v157 = vld [vmem:[#allocation5 + $0x24] sm:$0xf]
    %v158 = vld [vmem:[#allocation5 + $0x28] sm:$0xf]
    %v159 = vld [vmem:[#allocation5 + $0x2c] sm:$0xf]
    %v160 = vld [vmem:[#allocation5 + $0x30] sm:$0xf]
    %v161 = vld [vmem:[#allocation5 + $0x34] sm:$0xf]
    %v162 = vld [vmem:[#allocation5 + $0x38] sm:$0xf]
    %v163 = vld [vmem:[#allocation5 + $0x3c] sm:$0xf]
    %v164 = vld [vmem:[%s4] sm:$0x1]
    %v166 = vperm.slane %v164, 0
    %v184 = vunpack.c.l.b16 %v148
    %v185 = vunpack.c.l.b16 %v149
    %v186 = vunpack.c.l.b16 %v150
    %v187 = vunpack.c.l.b16 %v151
    %v188 = vunpack.c.l.b16 %v152
    %v189 = vunpack.c.l.b16 %v153
    %v190 = vunpack.c.l.b16 %v154
    %v191 = vunpack.c.l.b16 %v155
    %v192 = vunpack.c.l.b16 %v156
    %v193 = vunpack.c.l.b16 %v157
    %v194 = vunpack.c.l.b16 %v158
    %v195 = vunpack.c.l.b16 %v159
    %v196 = vunpack.c.l.b16 %v160
    %v197 = vunpack.c.l.b16 %v161
    %v198 = vunpack.c.l.b16 %v162
    %v199 = vunpack.c.l.b16 %v163
    %v200 = vpack.c.b16 %v185, %v184
    %v201 = vpack.c.b16 %v187, %v186
    %v202 = vpack.c.b16 %v189, %v188
    %v203 = vpack.c.b16 %v191, %v190
    %v204 = vpack.c.b16 %v193, %v192
    %v205 = vpack.c.b16 %v195, %v194
    %v206 = vpack.c.b16 %v197, %v196
    %v207 = vpack.c.b16 %v199, %v198
    %216 = vmatpush.bf16.msra.mxu0 %v207
    %217 = vmatpush.bf16.msra.mxu0 %v206
    %218 = vmatpush.bf16.msra.mxu0 %v205
    %219 = vmatpush.bf16.msra.mxu0 %v204
    %220 = vmatpush.bf16.msra.mxu0 %v203
    %221 = vmatpush.bf16.msra.mxu0 %v202
    %222 = vmatpush.bf16.msra.mxu0 %v201
    %223 = vmatpush.bf16.msra.mxu0 %v200
    %224 = vmatmul.bf16.gmra.mxu0 %v147
    %v225 = vpop.f32.mrf.mxu0
    %v226 = vadd.f32 %v166, %v225
    %v227 = vpop.f32.mrf.mxu0
    %v228 = vadd.f32 %v166, %v227
    %229 = vdwg.mxu0
    %v230 = vmax.f32 %v226, 0.0
    %v231 = vmax.f32 %v228, 0.0
    %v232 = vld [vmem:[%s5] sm:$0x1]
    %v233 = vpack.c.bf16 %v231, %v230
    %s234 = sld [smem:[#allocation2]]
    %v235 = vstv %s234
    %236 = vmatpush.bf16.xpose.msra.mxu0 0
    %237 = vmatpush.bf16.xpose.msra.mxu0 0
    %238 = vmatpush.bf16.xpose.msra.mxu0 0
    %239 = vmatpush.bf16.xpose.msra.mxu0 0
    %240 = vmatpush.bf16.xpose.msra.mxu0 0
    %241 = vmatpush.bf16.xpose.msra.mxu0 0
    %242 = vmatpush.bf16.xpose.msra.mxu0 0
    %243 = vmatpush.bf16.xpose.msra.mxu0 %v233
    %244 = vmatmul.bf16.gmra.mxu0 %v232
    %v245 = vpop.f32.mrf.mxu0
    %v246 = vadd.f32 %v235, %v245
    %v247 = vpop.f32.mrf.mxu0
    %248 = vdwg.mxu0
    %v249 = vsub.f32 0.0, %v246
    %v250 = vmul.f32 %v249, 1.442695
    %v251 = vpow.pop %v250
    %v252 = vadd.f32 %v251, 1.0
    %v253 = vrcp.pop %v252
    %v254 = vmul.f32 %v252, %v253
    %v255 = vsub.f32 1.0, %v254
    %v256 = vmul.f32 %v253, %v255
    %v257 = vadd.f32 %v253, %v256
    %vm258 = vweird.f32 %v252
    %vm259 = vweird.f32 %v253
    %vm260 = vmor %vm258, %vm259
    %v261 = vsel %vm260, %v253, %v257
    %v262 = vand.u32 2147483647, %v252
    %vm263 = vcmp.eq.f32.partialorder %v262, 8.507059e+37
    %v264 = vand.u32 %v252, 2147483648
    %v265 = vor.u32 1.1754944e-38, %v264
    %v266 = vsel %vm263, %v265, %v261
    %v267 = vmul.f32 1.0, %v266
    %vm268 = vcmask 122880
    %269 = vst.msk [vmem:[%s7] sm:$0x1] %vm268, %v267
    // Predicated region
    $region38: #{adversarial_network_forward.1} parent=1 // pred_check
      _
    $region39: #{adversarial_network_forward.1} parent=1 // pred_check_branch
      %271 = sbr.rel (0) target = $region41
    $region40: #{adversarial_network_forward.1} parent=1 // pred_region
      _
    $region41: #{adversarial_network_forward.1} parent=1 // pred_fallthru
      _
    // Predicated region
    $region42: #{adversarial_network_forward.1} parent=1 // pred_check
      _
    $region43: #{adversarial_network_forward.1} parent=1 // pred_check_branch
      %273 = sbr.rel (0) target = $region45
    $region44: #{adversarial_network_forward.1} parent=1 // pred_region
      _
    $region45: #{adversarial_network_forward.1} parent=1 // pred_fallthru
      _
    %274 = vsyncpa [#allocation4], 1
    %275 = vsyncpa [#allocation6], 1

</llo_original>
